<compile_context>
chip_gen: v7x
topology: tpu7x:2x2x1
jax: 0.10.0
libtpu: 0.0.40
codegen_flags: <defaults>
</compile_context>

<pallas_src>
import math

import jax
import jax.numpy as jnp
from jax.experimental import pallas as pl
from jax.experimental.pallas import tpu as pltpu


def _layer_scale_kernel(x_ref, gamma_ref, o_ref):
    # x_ref: (tile_rows, lane_tile) tile; gamma_ref: (1, lane_tile) broadcast row.
    o_ref[...] = x_ref[...] * gamma_ref[...]


def _sublane_multiple(dtype) -> int:
    itemsize = jnp.dtype(dtype).itemsize
    if itemsize >= 4:
        return 8
    if itemsize == 2:
        return 16
    return 32


def _chip_config():
    """Per-generation (block_bytes, vmem_limit_bytes, pipeline_depth)."""
    vmem_cap = 128 << 20
    try:  # trace-time HW query; fall back to the 128 MiB (v5e/v6e) assumption.
        vmem_cap = int(pltpu.get_tpu_info().vmem_capacity_bytes)
    except Exception:
        pass
    if vmem_cap <= (64 << 20):
        # v7x-class: 64 MiB VMEM / ~3.2 TB/s HBM.  Bigger blocks keep the
        # ~0.35 us per-grid-step cost hidden, 3-deep buffering adds DMA slack,
        # and the limit leaves headroom under the 64 MiB physical VMEM.
        return 6 << 20, 48 << 20, 3
    # v5e / v6e class (128 MiB VMEM).  ~4 MiB blocks sit at the measured
    # elementwise HBM-roofline knee on v6e and do not pessimize v5e.
    return 4 << 20, 32 << 20, 2


def _block_spec(tile_rows, lane_tile, index_map, depth):
    if depth > 2:
        return pl.BlockSpec((tile_rows, lane_tile), index_map,
                            pipeline_mode=pl.Buffered(depth))
    return pl.BlockSpec((tile_rows, lane_tile), index_map)


def _layer_scale_2d(x2d, gamma_row, *, block_bytes, vmem_limit, depth, donate_x):
    """x2d: (rows_f, lane_dim); gamma_row: (lane_dim,), already in x2d.dtype."""
    rows_f, lane_dim = x2d.shape
    itemsize = jnp.dtype(x2d.dtype).itemsize
    sub = _sublane_multiple(x2d.dtype)
    gamma2d = gamma_row.reshape(1, lane_dim)

    # --- Lane tiling: 2D grid fallback for extremely wide (folded) lane dims. ---
    max_lane_tile = max(128, ((block_bytes // (sub * itemsize)) // 128) * 128)
    lane_tile = lane_dim if lane_dim <= max_lane_tile else max_lane_tile
    lane_blocks = pl.cdiv(lane_dim, lane_tile)

    # --- Row tiling: ~block_bytes per block, rows a multiple of the sublane pack. ---
    tile_rows = max(sub, block_bytes // (lane_tile * itemsize))
    tile_rows = (tile_rows // sub) * sub
    if lane_blocks == 1:
        # Keep a multi-step grid (>= 4 blocks) when the tensor is big enough:
        # shards across both TensorCores on v7x and keeps DMA/compute overlapped.
        total_bytes = rows_f * lane_dim * itemsize
        if total_bytes >= (4 << 20):
            min_steps = 4
            cap = -(-rows_f // min_steps)                     # ceil(rows_f / 4)
            cap = max(sub, ((cap + sub - 1) // sub) * sub)    # round up to sublane pack
            tile_rows = min(tile_rows, cap)
    if tile_rows >= rows_f:
        tile_rows = rows_f  # full-extent block is always legal
    row_blocks = pl.cdiv(rows_f, tile_rows)

    cost = pl.CostEstimate(
        flops=rows_f * lane_dim,
        transcendentals=0,
        bytes_accessed=2 * rows_f * lane_dim * itemsize + lane_dim * itemsize,
    )

    return pl.pallas_call(
        _layer_scale_kernel,
        out_shape=jax.ShapeDtypeStruct((rows_f, lane_dim), x2d.dtype),
        grid_spec=pltpu.PrefetchScalarGridSpec(
            num_scalar_prefetch=0,
            grid=(row_blocks, lane_blocks),
            in_specs=[
                _block_spec(tile_rows, lane_tile, lambda i, j: (i, j), depth),
                pl.BlockSpec((1, lane_tile), lambda i, j: (0, j)),
            ],
            out_specs=_block_spec(tile_rows, lane_tile, lambda i, j: (i, j), depth),
        ),
        compiler_params=pltpu.CompilerParams(
            dimension_semantics=("parallel", "parallel"),
            vmem_limit_bytes=vmem_limit,
        ),
        cost_estimate=cost,
        input_output_aliases=({0: 0} if donate_x else {}),
    )(x2d, gamma2d)


def layer_scale(x: jax.Array, gamma: jax.Array, *,
                block_bytes: int | None = None,
                donate_x: bool = False) -> jax.Array:
    """y = x * gamma with gamma of shape (dim,) == x.shape[-1] (timm LayerScale fwd).

    NOTE on dtype: gamma is cast to x.dtype before the multiply, so bf16
    activations stay bf16 (timm-under-autocast semantics) rather than promoting
    to fp32 as raw PyTorch type promotion would.
    """
    orig_shape = x.shape
    dim = orig_shape[-1]
    assert gamma.shape == (dim,), f"gamma shape {gamma.shape} != ({dim},)"

    cfg_block, vmem_limit, depth = _chip_config()
    if block_bytes is None:
        block_bytes = cfg_block

    rows = x.size // dim
    gamma_x = gamma.astype(x.dtype)
    x2 = x.reshape(rows, dim)

    # --- Lane-dense folding: make the kernel's last axis a multiple of 128. ---
    # If dim % 128 != 0, fold `base` consecutive rows into one lane-dense row.
    # Rows that don't fit the fold (< base of them) are handled by a tiny XLA
    # multiply so the bulk keeps unmasked, full-lane stores.
    if dim % 128 != 0:
        base = math.lcm(dim, 128) // dim
        rows_main = (rows // base) * base
        fold = base
        while rows_main > 0 and dim * fold < 512 and rows_main % (fold * 2) == 0:
            fold *= 2
    else:
        rows_main = rows
        fold = 1

    outputs = []
    if rows_main > 0:
        lane_dim = dim * fold
        rows_f = rows_main // fold
        x_main = x2[:rows_main].reshape(rows_f, lane_dim)
        gamma_row = gamma_x if fold == 1 else jnp.tile(gamma_x, fold)
        y_main = _layer_scale_2d(
            x_main, gamma_row, block_bytes=block_bytes,
            vmem_limit=vmem_limit, depth=depth, donate_x=donate_x,
        )
        outputs.append(y_main.reshape(rows_main, dim))
    if rows_main < rows:
        # Fewer than `base` (<= 128) leftover rows: not worth a masked-store
        # kernel launch; a plain XLA multiply handles the tail.
        outputs.append(x2[rows_main:] * gamma_x)

    y2 = outputs[0] if len(outputs) == 1 else jnp.concatenate(outputs, axis=0)
    return y2.reshape(orig_shape)


if __name__ == "__main__":
    key = jax.random.PRNGKey(0)
    init_values = 1e-5

    # --- Main check: shapes matching the module (batch, seq, dim), f32. ---
    batch, seq, dim = 2, 8, 32
    gamma = init_values * jnp.ones((dim,), dtype=jnp.float32)  # nn.Parameter(init * ones(dim))
    x = jax.random.normal(key, (batch, seq, dim), dtype=jnp.float32)

    y = jax.block_until_ready(layer_scale(x, gamma))
    y_ref = x * gamma
    assert y.shape == x.shape
    assert jnp.allclose(y, y_ref, atol=1e-6, rtol=1e-6)

    # --- Secondary check: bf16 activations, dim already lane-aligned (256). ---
    dim2 = 256
    gamma2 = init_values * jnp.ones((dim2,), dtype=jnp.float32)
    x2 = jax.random.normal(jax.random.PRNGKey(0), (2, 9, dim2), dtype=jnp.bfloat16)

    y2 = jax.block_until_ready(layer_scale(x2, gamma2))
    y2_ref = x2 * gamma2.astype(jnp.bfloat16)
    assert y2.shape == x2.shape
    assert jnp.allclose(
        y2.astype(jnp.float32), y2_ref.astype(jnp.float32), atol=1e-6, rtol=1e-2
    )

    # --- Third check: dim not a multiple of 128 AND rows not divisible by the
    #     fold base -> exercises the lane-dense-bulk + XLA-remainder split. ---
    dim3 = 96
    gamma3 = init_values * jnp.ones((dim3,), dtype=jnp.float32)
    x3 = jax.random.normal(jax.random.PRNGKey(0), (2, 7, dim3), dtype=jnp.float32)

    y3 = jax.block_until_ready(layer_scale(x3, gamma3))
    y3_ref = x3 * gamma3
    assert y3.shape == x3.shape
    assert jnp.allclose(y3, y3_ref, atol=1e-6, rtol=1e-6)

    print("KERNEL_OK")
</pallas_src>

<mosaic_0001>
module attributes {stable_mosaic.version = 11 : i64} {
  func.func @_layer_scale_kernel(%arg0: i32, %arg1: i32, %arg2: memref<1x512xf32, #tpu.memory_space<vmem>>, %arg3: memref<1x512xf32, #tpu.memory_space<vmem>>, %arg4: memref<1x512xf32, #tpu.memory_space<vmem>>) attributes {dimension_semantics = [#tpu.dimension_semantics<parallel>, #tpu.dimension_semantics<parallel>], iteration_bounds = array<i64: 1, 1>, scalar_prefetch = 0 : i64, scratch_operands = 0 : i64, tpu.core_type = #tpu.core_type<tc>, window_params = [{transform_indices = @transform_0, window_bounds = array<i64: 1, 512>}, {transform_indices = @transform_1, window_bounds = array<i64: 1, 512>}, {transform_indices = @transform_2, window_bounds = array<i64: 1, 512>}]} {
    %c0 = arith.constant 0 : index
    %c0_0 = arith.constant 0 : index
    %0 = vector.load %arg2[%c0, %c0_0] : memref<1x512xf32, #tpu.memory_space<vmem>>, vector<1x512xf32>
    %c0_1 = arith.constant 0 : index
    %c0_2 = arith.constant 0 : index
    %1 = vector.load %arg3[%c0_1, %c0_2] : memref<1x512xf32, #tpu.memory_space<vmem>>, vector<1x512xf32>
    %2 = arith.mulf %0, %1 : vector<1x512xf32>
    %c0_3 = arith.constant 0 : index
    %c0_4 = arith.constant 0 : index
    %3 = vector.load %arg4[%c0_3, %c0_4] : memref<1x512xf32, #tpu.memory_space<vmem>>, vector<1x512xf32>
    tpu.vector_store %arg4[%c0_3, %c0_4], %2 {strides = array<i32>} : memref<1x512xf32, #tpu.memory_space<vmem>>, vector<1x512xf32>,
    return
  }
  func.func @transform_0(%arg0: i32, %arg1: i32) -> (i32, i32) {
    %c0_i32 = arith.constant 0 : i32
    return %arg0, %arg1 : i32, i32
  }
  func.func @transform_1(%arg0: i32, %arg1: i32) -> (i32, i32) {
    %c0_i32 = arith.constant 0 : i32
    %c0_i32_0 = arith.constant 0 : i32
    return %c0_i32, %arg1 : i32, i32
  }
  func.func @transform_2(%arg0: i32, %arg1: i32) -> (i32, i32) {
    %c0_i32 = arith.constant 0 : i32
    return %arg0, %arg1 : i32, i32
  }
}

</mosaic_0001>

<llo_original>
// kernel: tpu_custom_call.1
$region0: #{tpu_custom_call.1}
  #allocation0 [shape = 'u32[]', space=smem, size = 0x4, offset = 0x4, fixed_abs, tag = 'smem constant byte address 0x4 - core index']
  #allocation1 [shape = 'u32[144,128]{1,0:T(1,128)}', space=vmem, size = 0x12000, scoped, tag = 'internal scratch']
  %s0 = inlined_call_operand.hbm [shape: f32[1,512], index: 0, kind: input, shape index: {}]
  %s1 = inlined_call_operand.hbm [shape: f32[1,512], index: 1, kind: input, shape index: {}]
  %s2 = inlined_call_operand.hbm [shape: f32[1,512], index: 2, kind: output, shape index: {}]
  %s3 = sld [smem:[#allocation0]]
  $region26: #{tpu_custom_call.1} parent=0
    _
  %s5 = ssub.s32 1, %s3
  %s6 = scalar_select 0, %s5, %s3
  $region1: #{tpu_custom_call.1} parent=0
    #allocation2 [shape = 'u8[2048]{0}', space=vmem, size = 0x800, scoped, tag = 'input window, operand 0, single buffered']
    #allocation3 [shape = 's32[1]{0}', space=sflag, size = 0x4, scoped, tag = 'scoped memory for tpu_custom_call.1']
    #allocation4 [shape = 's32[1]{0}', space=sflag, size = 0x4, scoped, tag = 'scoped memory for tpu_custom_call.1']
    #allocation5 [shape = 'u8[2048]{0}', space=vmem, size = 0x800, scoped, tag = 'input window, operand 1, single buffered']
    #allocation6 [shape = 's32[1]{0}', space=sflag, size = 0x4, scoped, tag = 'scoped memory for tpu_custom_call.1']
    #allocation7 [shape = 'u8[2048]{0}', space=vmem, size = 0x800, scoped, tag = 'output window, operand 0, single buffered']
    %7 = vsyncpa [#allocation3], 0
    %8 = vsyncpa [#allocation6], 0
    %9 = vsyncpa [#allocation4], 0
    // Predicated region
    $region2: #{tpu_custom_call.1} parent=1 // pred_check
      _
    $region3: #{tpu_custom_call.1} parent=1 // pred_check_branch
      %11 = sbr.rel (0) target = $region5
    $region4: #{tpu_custom_call.1} parent=1 // pred_region
      %s13 = ssub.s32 64, 64
      %14 = vsyncadd [#allocation3], %s13
      %s16 = sshll.u32 [#allocation2], 4
      %s17 = int_to_ptr.vmem [resolvable:$true] %s16
      %19 = dma.hbm_to_vmem [thread:$0]  %s0, 64, %s17, [#allocation3]
    $region5: #{tpu_custom_call.1} parent=1 // pred_fallthru
      _
    // Predicated region
    $region6: #{tpu_custom_call.1} parent=1 // pred_check
      _
    $region7: #{tpu_custom_call.1} parent=1 // pred_check_branch
      %21 = sbr.rel (0) target = $region9
    $region8: #{tpu_custom_call.1} parent=1 // pred_region
      %s23 = ssub.s32 64, 64
      %24 = vsyncadd [#allocation6], %s23
      %s26 = sshll.u32 [#allocation5], 4
      %s27 = int_to_ptr.vmem [resolvable:$true] %s26
      %29 = dma.hbm_to_vmem [thread:$0]  %s1, 64, %s27, [#allocation6]
    $region9: #{tpu_custom_call.1} parent=1 // pred_fallthru
      _
    // Predicated region
    $region10: #{tpu_custom_call.1} parent=1 // pred_check
      _
    $region11: #{tpu_custom_call.1} parent=1 // pred_check_branch
      %31 = sbr.rel (0) target = $region13
    $region12: #{tpu_custom_call.1} parent=1 // pred_region
      %32 = dma.done [#allocation3], 64
    $region13: #{tpu_custom_call.1} parent=1 // pred_fallthru
      _
    // Predicated region
    $region14: #{tpu_custom_call.1} parent=1 // pred_check
      _
    $region15: #{tpu_custom_call.1} parent=1 // pred_check_branch
      %34 = sbr.rel (0) target = $region17
    $region16: #{tpu_custom_call.1} parent=1 // pred_region
      %35 = dma.done [#allocation6], 64
    $region17: #{tpu_custom_call.1} parent=1 // pred_fallthru
      _
    %v36 = vld [vmem:[#allocation2] sm:$0xf]
    %v37 = vld [vmem:[#allocation5] sm:$0xf]
    %v38 = vmul.f32 %v36, %v37
    %v39 = vlaneseq
    %vm40 = vcmp.ge.s32.totalorder %v39, 0
    %vm41 = vcmp.lt.s32.totalorder %v39, 512
    %vm42 = vmand %vm40, %vm41
    %43 = vst.msk [vmem:[#allocation7] sm:$0xf] %vm42, %v38
    // Predicated region
    $region18: #{tpu_custom_call.1} parent=1 // pred_check
      _
    $region19: #{tpu_custom_call.1} parent=1 // pred_check_branch
      %45 = sbr.rel (0) target = $region21
    $region20: #{tpu_custom_call.1} parent=1 // pred_region
      %s47 = ssub.s32 64, 64
      %48 = vsyncadd [#allocation4], %s47
      %s50 = sshll.u32 [#allocation7], 4
      %s51 = int_to_ptr.vmem [resolvable:$true] %s50
      %53 = dma.vmem_to_hbm [thread:$0]  %s51, 64, %s2, [#allocation4]
    $region21: #{tpu_custom_call.1} parent=1 // pred_fallthru
      _
    // Predicated region
    $region22: #{tpu_custom_call.1} parent=1 // pred_check
      _
    $region23: #{tpu_custom_call.1} parent=1 // pred_check_branch
      %55 = sbr.rel (0) target = $region25
    $region24: #{tpu_custom_call.1} parent=1 // pred_region
      %56 = dma.done [#allocation4], 64
    $region25: #{tpu_custom_call.1} parent=1 // pred_fallthru
      _
    %57 = vsyncpa [#allocation3], 1
    %58 = vsyncpa [#allocation6], 1
    %59 = vsyncpa [#allocation4], 1

</llo_original>
